<compile_context>
chip_gen: v7x
topology: tpu7x:2x2x1
jax: 0.10.0
libtpu: 0.0.40
codegen_flags: <defaults>
</compile_context>

<pallas_src>
import functools

import jax
import jax.numpy as jnp
from jax.experimental import pallas as pl
from jax.experimental.pallas import tpu as pltpu

_MiB = 1 << 20


def _round_up(x, m):
    return ((x + m - 1) // m) * m


def _cdiv(a, b):
    return -(-a // b)


@functools.lru_cache(maxsize=1)
def _chip_info():
    """Returns (device_kind lowercased, physical VMEM bytes, two_tensorcores)."""
    kind = ""
    try:
        kind = jax.devices()[0].device_kind.lower()
    except Exception:
        pass
    try:
        cap = int(pltpu.get_tpu_info().vmem_capacity_bytes)
    except Exception:
        cap = 64 * _MiB
    two_core = "v7" in kind
    return kind, cap, two_core


def _vmem_budget(kind, cap):
    """Double-buffer budget for the streamed (zs, qs, qf) tiles."""
    if "v5" in kind:
        return 12 * _MiB                     # 16 MiB scoped default on v5e
    if "v7" in kind:
        return min(24 * _MiB, cap // 2)      # 64 MiB physical per TC
    return min(32 * _MiB, cap // 2)          # v6e / unknown (128 MiB physical)


def _choose_tiling(B, C, D, zs_itemsize, q_itemsize):
    """Rows-per-tile, megacore sharding and vmem limit from the chip budget."""
    kind, cap, two_core = _chip_info()
    budget = _vmem_budget(kind, cap)

    # Resident label block: (B_pad, 1) int32 lane-pads to ~512 B per row.
    lbl_est = _round_up(B, 8) * 512

    # Streamed bytes per batch row (zs + qs + qf); label is resident.
    row_bytes = C * zs_itemsize + 2 * D * q_itemsize
    align = 16 if min(zs_itemsize, q_itemsize) <= 2 else 8   # bf16 packs 16 rows

    stream_budget = max(budget - 2 * lbl_est, budget // 2)
    tb = stream_budget // (2 * row_bytes)                    # double-buffered
    tb = int(min(tb, 1024))
    tb = max(align, (tb // align) * align)
    tb = min(tb, _round_up(B, align))

    vmem_need = 2 * tb * row_bytes + 2 * lbl_est + 2 * _MiB  # buffers + scratch
    vmem_limit = int(min(cap, max(vmem_need, 16 * _MiB)))

    total_tiles = _cdiv(B, tb)
    # v7x: always use both TensorCores when there is >1 tile (the valid-row
    # mask absorbs the duplicated trailing tile).  Single-core chips only
    # shard when it costs nothing (even tile count).
    if total_tiles >= 2 and (two_core or total_tiles % 2 == 0):
        num_shards = 2
    else:
        num_shards = 1
    tiles_per_shard = _cdiv(total_tiles, num_shards)
    return tb, num_shards, tiles_per_shard, total_tiles, vmem_limit, kind


def _losses_kernel(zs_ref, label_ref, qs_ref, qf_ref, out_ref,
                   iota_ref, acc_ce_ref, acc_sq_ref,
                   *, b_actual, tiles_per_shard, tb, native_pick):
    """Per-tile partial sums of cross-entropy and squared error.

    Grid: (shards [parallel], tiles-per-shard [arbitrary/reduction]).
    iota_ref  : VMEM (1, C) int32   -- class ids, written once per shard.
    acc_*_ref : VMEM (TB, 1) f32    -- per-row running sums (vector add only
                                       on the loop-carried path).
    out_ref   : SMEM (1, 2) block   -- [ce_sum, sq_sum], written at last tile.
    """
    s = pl.program_id(0)
    i = pl.program_id(1)

    @pl.when(i == 0)
    def _():
        iota_ref[...] = jax.lax.broadcasted_iota(jnp.int32, iota_ref.shape, 1)
        acc_ce_ref[...] = jnp.zeros_like(acc_ce_ref)
        acc_sq_ref[...] = jnp.zeros_like(acc_sq_ref)

    tile_idx = s * tiles_per_shard + i          # UNclamped logical tile id
    start = pl.multiple_of(tile_idx * tb, tb)
    lbl = label_ref[pl.ds(start, tb), :]        # (TB, 1) int32, resident block

    # Valid-row mask: ragged tail + clamped duplicate tiles (kept as a select
    # so garbage/NaN in padded rows cannot leak into the sums).
    row_in_tile = jax.lax.broadcasted_iota(jnp.int32, (tb, 1), 0)
    valid = (tile_idx * tb + row_in_tile) < b_actual          # (TB, 1) bool

    # --- softmax cross-entropy: per-row lse - picked -------------------------
    zs_nat = zs_ref[...]                         # (TB, C), native dtype
    zs32 = zs_nat.astype(jnp.float32)
    eq = iota_ref[...] == lbl                    # (1,C) == (TB,1) -> (TB,C)
    if native_pick:
        # bf16 select/max halves vreg traffic on v6e/v7x; numerically exact
        # (one nonzero term per row; max is exact in bf16).
        picked = jnp.sum(jnp.where(eq, zs_nat, jnp.zeros((), zs_nat.dtype)),
                         axis=-1, keepdims=True).astype(jnp.float32)
        m = jnp.max(zs_nat, axis=-1, keepdims=True).astype(jnp.float32)
    else:
        picked = jnp.sum(jnp.where(eq, zs32, 0.0), axis=-1, keepdims=True)
        m = jnp.max(zs32, axis=-1, keepdims=True)
    lse = m + jnp.log(jnp.sum(jnp.exp(zs32 - m), axis=-1, keepdims=True))
    acc_ce_ref[...] += jnp.where(valid, lse - picked, 0.0)

    # --- MSE: per-row squared-error sums, masked per row ---------------------
    d = qs_ref[...].astype(jnp.float32) - qf_ref[...].astype(jnp.float32)
    row_sq = jnp.sum(d * d, axis=-1, keepdims=True)          # (TB, 1)
    acc_sq_ref[...] += jnp.where(valid, row_sq, 0.0)

    @pl.when(i == pl.num_programs(1) - 1)
    def _():
        out_ref[0, 0] = jnp.sum(acc_ce_ref[...])
        out_ref[0, 1] = jnp.sum(acc_sq_ref[...])


@jax.jit
def _losses_pallas(zs, label2d, qs, qf):
    B, C = zs.shape
    _, D = qs.shape
    tb, ns, tps, total_tiles, vmem_limit, kind = _choose_tiling(
        B, C, D, zs.dtype.itemsize, qs.dtype.itemsize)
    native_pick = (zs.dtype == jnp.bfloat16) and ("v5" not in kind)

    # Pad the (tiny) label column so the resident block and in-kernel pl.ds
    # slices of duplicated/ragged tiles stay in bounds.
    b_pad = ns * tps * tb
    label_pad = label2d
    if b_pad != B:
        label_pad = jnp.pad(label2d, ((0, b_pad - B), (0, 0)))

    last_tile = total_tiles - 1

    def row_idx(s, i):
        # Clamp: duplicated trailing tiles (odd tile count on the two-core
        # shard split) re-read the last real tile; the in-kernel valid mask
        # zeroes their contribution.
        return (jnp.minimum(s * tps + i, last_tile), 0)

    sums = pl.pallas_call(
        functools.partial(_losses_kernel, b_actual=B, tiles_per_shard=tps,
                          tb=tb, native_pick=native_pick),
        grid=(ns, tps),
        in_specs=[
            pl.BlockSpec((tb, C), row_idx),                      # zs (logits)
            pl.BlockSpec((b_pad, 1), lambda s, i: (0, 0)),       # label, resident
            pl.BlockSpec((tb, D), row_idx),                      # qs
            pl.BlockSpec((tb, D), row_idx),                      # qf
        ],
        out_specs=pl.BlockSpec((1, 2), lambda s, i: (s, 0),
                               memory_space=pltpu.SMEM),
        out_shape=jax.ShapeDtypeStruct((ns, 2), jnp.float32),
        scratch_shapes=[
            pltpu.VMEM((1, C), jnp.int32),       # class-id iota (hoisted)
            pltpu.VMEM((tb, 1), jnp.float32),    # CE per-row accumulator
            pltpu.VMEM((tb, 1), jnp.float32),    # SqErr per-row accumulator
        ],
        compiler_params=pltpu.CompilerParams(
            dimension_semantics=("parallel", "arbitrary"),
            vmem_limit_bytes=vmem_limit),
        cost_estimate=pl.CostEstimate(
            flops=int(5 * B * C + 3 * B * D),
            transcendentals=int(B * C + B),
            bytes_accessed=int(zs.size * zs.dtype.itemsize
                               + (qs.size + qf.size) * qs.dtype.itemsize
                               + b_pad * 4 + ns * 2 * 4),
        ),
    )(zs, label_pad, qs, qf)

    ce = jnp.sum(sums[:, 0]) / jnp.float32(B)        # 'mean' over batch
    mse = jnp.sum(sums[:, 1]) / jnp.float32(B * D)   # 'mean' over elements
    return ce, mse


class Losses:
    """JAX/Pallas port of the PyTorch `Losses` builder module."""

    def __init__(self, loss_cfg):
        self.loss_cfg = loss_cfg

    def __call__(self, zs, qs, qf, label):
        label2d = label.astype(jnp.int32).reshape(-1, 1)
        # Inputs stay in native dtype (bf16 or f32); upcast happens in-kernel.
        ce, mse = _losses_pallas(zs, label2d, qs, qf)
        # TODO(synk): only CrossEntropyLoss / MSELoss are supported (the
        # reference resolves arbitrary class names via eval(name)).
        per_name = {"CrossEntropyLoss": ce, "MSELoss": mse}

        losses = {}
        _loss = jnp.float32(0.0)
        for name, cfg in self.loss_cfg.items():
            config = dict(cfg)
            weight = config.pop("weight")
            loss = per_name[name]
            losses[name] = weight * loss
            _loss = _loss + weight * loss
        losses["loss"] = _loss
        return losses


def _reference(zs, qs, qf, label, w_ce, w_mse):
    zs32 = zs.astype(jnp.float32)
    logp = jax.nn.log_softmax(zs32, axis=-1)
    ce = -jnp.mean(logp[jnp.arange(zs.shape[0]), label])
    mse = jnp.mean((qs.astype(jnp.float32) - qf.astype(jnp.float32)) ** 2)
    return ce, mse, w_ce * ce + w_mse * mse


if __name__ == "__main__":
    loss_cfg = {
        "CrossEntropyLoss": {"weight": 1.0},
        "MSELoss": {"weight": 0.5},
    }
    module = Losses(loss_cfg)

    # --- test 1: small aligned shapes ---------------------------------------
    B, C, D = 8, 32, 32
    key = jax.random.PRNGKey(0)
    k1, k2, k3, k4 = jax.random.split(key, 4)
    zs = jax.random.normal(k1, (B, C), dtype=jnp.float32)
    qs = jax.random.normal(k2, (B, D), dtype=jnp.float32)
    qf = jax.random.normal(k3, (B, D), dtype=jnp.float32)
    label = jax.random.randint(k4, (B,), 0, C, dtype=jnp.int32)

    out = module(zs, qs, qf, label)
    out = jax.tree_util.tree_map(jax.block_until_ready, out)

    ce_ref, mse_ref, tot_ref = _reference(zs, qs, qf, label, 1.0, 0.5)
    assert jnp.allclose(out["CrossEntropyLoss"], ce_ref, rtol=1e-5, atol=1e-5)
    assert jnp.allclose(out["MSELoss"], 0.5 * mse_ref, rtol=1e-5, atol=1e-5)
    assert jnp.allclose(out["loss"], tot_ref, rtol=1e-5, atol=1e-5)

    # --- test 2: ragged batch (exercises edge-tile masking + label pad) -----
    B2, C2, D2 = 37, 160, 96
    k5, k6, k7, k8 = jax.random.split(jax.random.PRNGKey(1), 4)
    zs2 = jax.random.normal(k5, (B2, C2), dtype=jnp.float32)
    qs2 = jax.random.normal(k6, (B2, D2), dtype=jnp.float32)
    qf2 = jax.random.normal(k7, (B2, D2), dtype=jnp.float32)
    label2 = jax.random.randint(k8, (B2,), 0, C2, dtype=jnp.int32)

    out2 = module(zs2, qs2, qf2, label2)
    out2 = jax.tree_util.tree_map(jax.block_until_ready, out2)

    ce_ref2, mse_ref2, tot_ref2 = _reference(zs2, qs2, qf2, label2, 1.0, 0.5)
    assert jnp.allclose(out2["CrossEntropyLoss"], ce_ref2, rtol=1e-5, atol=1e-5)
    assert jnp.allclose(out2["MSELoss"], 0.5 * mse_ref2, rtol=1e-5, atol=1e-5)
    assert jnp.allclose(out2["loss"], tot_ref2, rtol=1e-5, atol=1e-5)

    print("KERNEL_OK")
</pallas_src>

<mosaic_0001>
module attributes {stable_mosaic.version = 11 : i64} {
  func.func @_losses_kernel(%arg0: i32, %arg1: i32, %arg2: memref<8x32xf32, #tpu.memory_space<vmem>>, %arg3: memref<8x1xi32, #tpu.memory_space<vmem>>, %arg4: memref<8x32xf32, #tpu.memory_space<vmem>>, %arg5: memref<8x32xf32, #tpu.memory_space<vmem>>, %arg6: memref<1x2xf32, #tpu.memory_space<smem>>, %arg7: memref<1x32xi32, #tpu.memory_space<vmem>>, %arg8: memref<8x1xf32, #tpu.memory_space<vmem>>, %arg9: memref<8x1xf32, #tpu.memory_space<vmem>>) attributes {dimension_semantics = [#tpu.dimension_semantics<parallel>, #tpu.dimension_semantics<arbitrary>], iteration_bounds = array<i64: 1, 1>, scalar_prefetch = 0 : i64, scratch_operands = 3 : i64, tpu.core_type = #tpu.core_type<tc>, window_params = [{transform_indices = @transform_0, window_bounds = array<i64: 8, 32>}, {pipeline_mode = #tpu.pipeline_mode<synchronous>, transform_indices = @transform_1, window_bounds = array<i64: 8, 1>}, {transform_indices = @transform_2, window_bounds = array<i64: 8, 32>}, {transform_indices = @transform_3, window_bounds = array<i64: 8, 32>}, {transform_indices = @transform_4, window_bounds = array<i64: 1, 2>}]} {
    %c0_i32 = arith.constant 0 : i32
    %0 = arith.cmpi eq, %arg1, %c0_i32 : i32
    %1 = arith.extui %0 : i1 to i32
    %c0_i32_0 = arith.constant 0 : i32
    %2 = arith.cmpi ne, %1, %c0_i32_0 : i32
    scf.if %2 {
      %53 = tpu.iota {dimensions = array<i32: 1>} : vector<1x32xi32>
      %c0_27 = arith.constant 0 : index
      %c0_28 = arith.constant 0 : index
      %54 = vector.load %arg7[%c0_27, %c0_28] : memref<1x32xi32, #tpu.memory_space<vmem>>, vector<1x32xi32>
      tpu.vector_store %arg7[%c0_27, %c0_28], %53 {strides = array<i32>} : memref<1x32xi32, #tpu.memory_space<vmem>>, vector<1x32xi32>,
      %cst_29 = arith.constant 0.000000e+00 : f32
      %55 = vector.broadcast %cst_29 : f32 to vector<8x1xf32>
      %c0_30 = arith.constant 0 : index
      %c0_31 = arith.constant 0 : index
      %56 = vector.load %arg8[%c0_30, %c0_31] : memref<8x1xf32, #tpu.memory_space<vmem>>, vector<8x1xf32>
      tpu.vector_store %arg8[%c0_30, %c0_31], %55 {strides = array<i32>} : memref<8x1xf32, #tpu.memory_space<vmem>>, vector<8x1xf32>,
      %cst_32 = arith.constant 0.000000e+00 : f32
      %57 = vector.broadcast %cst_32 : f32 to vector<8x1xf32>
      %c0_33 = arith.constant 0 : index
      %c0_34 = arith.constant 0 : index
      %58 = vector.load %arg9[%c0_33, %c0_34] : memref<8x1xf32, #tpu.memory_space<vmem>>, vector<8x1xf32>
      tpu.vector_store %arg9[%c0_33, %c0_34], %57 {strides = array<i32>} : memref<8x1xf32, #tpu.memory_space<vmem>>, vector<8x1xf32>,
    } else {
    }
    %c1_i32 = arith.constant 1 : i32
    %3 = arith.muli %arg0, %c1_i32 : i32
    %4 = arith.addi %3, %arg1 : i32
    %c8_i32 = arith.constant 8 : i32
    %5 = arith.muli %4, %c8_i32 : i32
    %6 = tpu.assume_multiple %5, 8 : i32
    %7 = arith.index_cast %6 : i32 to index
    %c0 = arith.constant 0 : index
    %8 = vector.load %arg3[%7, %c0] : memref<8x1xi32, #tpu.memory_space<vmem>>, vector<8x1xi32>
    %9 = tpu.iota {dimensions = array<i32: 0>} : vector<8x1xi32>
    %c8_i32_1 = arith.constant 8 : i32
    %10 = arith.muli %4, %c8_i32_1 : i32
    %11 = vector.broadcast %10 : i32 to vector<8x1xi32>
    %12 = arith.addi %11, %9 : vector<8x1xi32>
    %c8_i32_2 = arith.constant 8 : i32
    %13 = vector.broadcast %c8_i32_2 : i32 to vector<8x1xi32>
    %14 = arith.cmpi slt, %12, %13 : vector<8x1xi32>
    %c0_3 = arith.constant 0 : index
    %c0_4 = arith.constant 0 : index
    %15 = vector.load %arg2[%c0_3, %c0_4] : memref<8x32xf32, #tpu.memory_space<vmem>>, vector<8x32xf32>
    %c0_5 = arith.constant 0 : index
    %c0_6 = arith.constant 0 : index
    %16 = vector.load %arg7[%c0_5, %c0_6] : memref<1x32xi32, #tpu.memory_space<vmem>>, vector<1x32xi32>
    %17 = vector.broadcast %16 : vector<1x32xi32> to vector<8x32xi32>
    %18 = vector.broadcast %8 : vector<8x1xi32> to vector<8x32xi32>
    %19 = arith.cmpi eq, %17, %18 : vector<8x32xi32>
    %cst = arith.constant 0.000000e+00 : f32
    %20 = vector.broadcast %cst : f32 to vector<8x32xf32>
    %21 = arith.select %19, %15, %20 : vector<8x32xi1>, vector<8x32xf32>
    %cst_7 = arith.constant dense<0.000000e+00> : vector<8xf32>
    %22 = vector.multi_reduction <add>, %21, %cst_7 [1] : vector<8x32xf32> to vector<8xf32>
    %23 = vector.shape_cast %22 : vector<8xf32> to vector<8x1xf32>
    %cst_8 = arith.constant dense<0xFF800000> : vector<8xf32>
    %24 = vector.multi_reduction <maximumf>, %15, %cst_8 [1] : vector<8x32xf32> to vector<8xf32>
    %25 = vector.shape_cast %24 : vector<8xf32> to vector<8x1xf32>
    %26 = vector.broadcast %25 : vector<8x1xf32> to vector<8x32xf32>
    %27 = arith.subf %15, %26 : vector<8x32xf32>
    %28 = math.exp %27 : vector<8x32xf32>
    %cst_9 = arith.constant dense<0.000000e+00> : vector<8xf32>
    %29 = vector.multi_reduction <add>, %28, %cst_9 [1] : vector<8x32xf32> to vector<8xf32>
    %30 = vector.shape_cast %29 : vector<8xf32> to vector<8x1xf32>
    %31 = math.log %30 : vector<8x1xf32>
    %32 = arith.addf %25, %31 : vector<8x1xf32>
    %c0_10 = arith.constant 0 : index
    %c0_11 = arith.constant 0 : index
    %33 = vector.load %arg8[%c0_10, %c0_11] : memref<8x1xf32, #tpu.memory_space<vmem>>, vector<8x1xf32>
    %34 = arith.subf %32, %23 : vector<8x1xf32>
    %cst_12 = arith.constant 0.000000e+00 : f32
    %35 = vector.broadcast %cst_12 : f32 to vector<8x1xf32>
    %36 = arith.select %14, %34, %35 : vector<8x1xi1>, vector<8x1xf32>
    %37 = arith.addf %33, %36 : vector<8x1xf32>
    %c0_13 = arith.constant 0 : index
    %c0_14 = arith.constant 0 : index
    %38 = vector.load %arg8[%c0_13, %c0_14] : memref<8x1xf32, #tpu.memory_space<vmem>>, vector<8x1xf32>
    tpu.vector_store %arg8[%c0_13, %c0_14], %37 {strides = array<i32>} : memref<8x1xf32, #tpu.memory_space<vmem>>, vector<8x1xf32>,
    %c0_15 = arith.constant 0 : index
    %c0_16 = arith.constant 0 : index
    %39 = vector.load %arg4[%c0_15, %c0_16] : memref<8x32xf32, #tpu.memory_space<vmem>>, vector<8x32xf32>
    %c0_17 = arith.constant 0 : index
    %c0_18 = arith.constant 0 : index
    %40 = vector.load %arg5[%c0_17, %c0_18] : memref<8x32xf32, #tpu.memory_space<vmem>>, vector<8x32xf32>
    %41 = arith.subf %39, %40 : vector<8x32xf32>
    %42 = arith.mulf %41, %41 : vector<8x32xf32>
    %cst_19 = arith.constant dense<0.000000e+00> : vector<8xf32>
    %43 = vector.multi_reduction <add>, %42, %cst_19 [1] : vector<8x32xf32> to vector<8xf32>
    %44 = vector.shape_cast %43 : vector<8xf32> to vector<8x1xf32>
    %c0_20 = arith.constant 0 : index
    %c0_21 = arith.constant 0 : index
    %45 = vector.load %arg9[%c0_20, %c0_21] : memref<8x1xf32, #tpu.memory_space<vmem>>, vector<8x1xf32>
    %cst_22 = arith.constant 0.000000e+00 : f32
    %46 = vector.broadcast %cst_22 : f32 to vector<8x1xf32>
    %47 = arith.select %14, %44, %46 : vector<8x1xi1>, vector<8x1xf32>
    %48 = arith.addf %45, %47 : vector<8x1xf32>
    %c0_23 = arith.constant 0 : index
    %c0_24 = arith.constant 0 : index
    %49 = vector.load %arg9[%c0_23, %c0_24] : memref<8x1xf32, #tpu.memory_space<vmem>>, vector<8x1xf32>
    tpu.vector_store %arg9[%c0_23, %c0_24], %48 {strides = array<i32>} : memref<8x1xf32, #tpu.memory_space<vmem>>, vector<8x1xf32>,
    %c0_i32_25 = arith.constant 0 : i32
    %50 = arith.cmpi eq, %arg1, %c0_i32_25 : i32
    %51 = arith.extui %50 : i1 to i32
    %c0_i32_26 = arith.constant 0 : i32
    %52 = arith.cmpi ne, %51, %c0_i32_26 : i32
    scf.if %52 {
      %c0_27 = arith.constant 0 : index
      %c0_28 = arith.constant 0 : index
      %53 = vector.load %arg8[%c0_27, %c0_28] : memref<8x1xf32, #tpu.memory_space<vmem>>, vector<8x1xf32>
      %54 = vector.shape_cast %53 : vector<8x1xf32> to vector<1x8x1xf32>
      %cst_29 = arith.constant dense<0.000000e+00> : vector<1xf32>
      %55 = vector.multi_reduction <add>, %54, %cst_29 [1, 2] : vector<1x8x1xf32> to vector<1xf32>
      %56 = vector.shape_cast %55 : vector<1xf32> to vector<1x1x1xf32>
      %57 = vector.extract %56[0, 0, 0] : f32 from vector<1x1x1xf32>
      %c0_30 = arith.constant 0 : index
      %c0_31 = arith.constant 0 : index
      %58 = memref.load %arg6[%c0_30, %c0_31] : memref<1x2xf32, #tpu.memory_space<smem>>
      memref.store %57, %arg6[%c0_30, %c0_31] : memref<1x2xf32, #tpu.memory_space<smem>>
      %c0_32 = arith.constant 0 : index
      %c0_33 = arith.constant 0 : index
      %59 = vector.load %arg9[%c0_32, %c0_33] : memref<8x1xf32, #tpu.memory_space<vmem>>, vector<8x1xf32>
      %60 = vector.shape_cast %59 : vector<8x1xf32> to vector<1x8x1xf32>
      %cst_34 = arith.constant dense<0.000000e+00> : vector<1xf32>
      %61 = vector.multi_reduction <add>, %60, %cst_34 [1, 2] : vector<1x8x1xf32> to vector<1xf32>
      %62 = vector.shape_cast %61 : vector<1xf32> to vector<1x1x1xf32>
      %63 = vector.extract %62[0, 0, 0] : f32 from vector<1x1x1xf32>
      %c0_35 = arith.constant 0 : index
      %c1 = arith.constant 1 : index
      %64 = memref.load %arg6[%c0_35, %c1] : memref<1x2xf32, #tpu.memory_space<smem>>
      memref.store %63, %arg6[%c0_35, %c1] : memref<1x2xf32, #tpu.memory_space<smem>>
    } else {
    }
    return
  }
  func.func @transform_0(%arg0: i32, %arg1: i32) -> (i32, i32) {
    %c1_i32 = arith.constant 1 : i32
    %0 = arith.muli %arg0, %c1_i32 : i32
    %1 = arith.addi %0, %arg1 : i32
    %c0_i32 = arith.constant 0 : i32
    %2 = arith.minsi %1, %c0_i32 : i32
    %c0_i32_0 = arith.constant 0 : i32
    %c0_i32_1 = arith.constant 0 : i32
    return %2, %c0_i32_0 : i32, i32
  }
  func.func @transform_1(%arg0: i32, %arg1: i32) -> (i32, i32) {
    %c0_i32 = arith.constant 0 : i32
    %c0_i32_0 = arith.constant 0 : i32
    %c0_i32_1 = arith.constant 0 : i32
    return %c0_i32, %c0_i32_0 : i32, i32
  }
  func.func @transform_2(%arg0: i32, %arg1: i32) -> (i32, i32) {
    %c1_i32 = arith.constant 1 : i32
    %0 = arith.muli %arg0, %c1_i32 : i32
    %1 = arith.addi %0, %arg1 : i32
    %c0_i32 = arith.constant 0 : i32
    %2 = arith.minsi %1, %c0_i32 : i32
    %c0_i32_0 = arith.constant 0 : i32
    %c0_i32_1 = arith.constant 0 : i32
    return %2, %c0_i32_0 : i32, i32
  }
  func.func @transform_3(%arg0: i32, %arg1: i32) -> (i32, i32) {
    %c1_i32 = arith.constant 1 : i32
    %0 = arith.muli %arg0, %c1_i32 : i32
    %1 = arith.addi %0, %arg1 : i32
    %c0_i32 = arith.constant 0 : i32
    %2 = arith.minsi %1, %c0_i32 : i32
    %c0_i32_0 = arith.constant 0 : i32
    %c0_i32_1 = arith.constant 0 : i32
    return %2, %c0_i32_0 : i32, i32
  }
  func.func @transform_4(%arg0: i32, %arg1: i32) -> (i32, i32) {
    %c0_i32 = arith.constant 0 : i32
    %c0_i32_0 = arith.constant 0 : i32
    return %arg0, %c0_i32 : i32, i32
  }
}

</mosaic_0001>

<llo_original>
// kernel: _losses_pallas.1
$region0: #{_losses_pallas.1}
  #allocation0 [shape = 'u32[]', space=smem, size = 0x4, offset = 0x4, fixed_abs, tag = 'smem constant byte address 0x4 - core index']
  #allocation1 [shape = 'u32[144,128]{1,0:T(1,128)}', space=vmem, size = 0x12000, scoped, tag = 'internal scratch']
  #allocation2 [shape = 's32[1,32]{1,0:T(1,128)}', space=vmem, size = 0x200, scoped, tag = 'scratch operand']
  #allocation3 [shape = 'f32[8,1]{1,0:T(8,128)}', space=vmem, size = 0x1000, scoped, tag = 'scratch operand']
  #allocation4 [shape = 'f32[8,1]{1,0:T(8,128)}', space=vmem, size = 0x1000, scoped, tag = 'scratch operand']
  %s0 = inlined_call_operand.vmem [shape: f32[8,32], index: 0, kind: input, shape index: {}]
  %s1 = inlined_call_operand.vmem [shape: s32[8,1], index: 1, kind: input, shape index: {}]
  %s2 = inlined_call_operand.vmem [shape: f32[8,32], index: 2, kind: input, shape index: {}]
  %s3 = inlined_call_operand.hbm [shape: f32[8,32], index: 3, kind: input, shape index: {}]
  %s4 = inlined_call_operand.vmem [shape: f32[1,2], index: 4, kind: output, shape index: {}]
  %s5 = sld [smem:[#allocation0]]
  $region38: #{_losses_pallas.1} parent=0
    _
  %s7 = ssub.s32 1, %s5
  %s8 = scalar_select 0, %s7, %s5
  $region1: #{_losses_pallas.1} parent=0
    #allocation5 [shape = 'u8[4096]{0}', space=vmem, size = 0x1000, scoped, tag = 'input window, operand 3, single buffered']
    #allocation6 [shape = 's32[1]{0}', space=sflag, size = 0x4, scoped, tag = 'scoped memory for _losses_pallas.1']
    #allocation7 [shape = 's32[1]{0}', space=sflag, size = 0x4, scoped, tag = 'scoped memory for _losses_pallas.1']
    #allocation8 [shape = 'u8[512]{0}', space=smem, size = 0x200, scoped, tag = 'output window, operand 0, single buffered']
    %9 = vsyncpa [#allocation6], 0
    %10 = vsyncpa [#allocation7], 0
    // Predicated region
    $region2: #{_losses_pallas.1} parent=1 // pred_check
      _
    $region3: #{_losses_pallas.1} parent=1 // pred_check_branch
      %12 = sbr.rel (0) target = $region5
    $region4: #{_losses_pallas.1} parent=1 // pred_region
      %s13 = sadd.s32 0, 0
      %p14 = scmp.lt.s32.totalorder %s13, 0
      %s15 = scalar_select %p14, %s13, 0
      %p16 = scmp.lt.s32.totalorder %s15, 0
      %s17 = scalar_select %p16, %s15, 0
      %s18 = smul.addr %s17, 8
      %s19 = scalar_lea.vmem %s0, %s18
      %s20 = sadd.s32 0, 0
      %p21 = scmp.lt.s32.totalorder %s20, 0
      %s22 = scalar_select %p21, %s20, 0
    $region5: #{_losses_pallas.1} parent=1 // pred_fallthru
      _
    // Predicated region
    $region6: #{_losses_pallas.1} parent=1 // pred_check
      _
    $region7: #{_losses_pallas.1} parent=1 // pred_check_branch
      %24 = sbr.rel (0) target = $region9
    $region8: #{_losses_pallas.1} parent=1 // pred_region
      _
    $region9: #{_losses_pallas.1} parent=1 // pred_fallthru
      _
    // Predicated region
    $region10: #{_losses_pallas.1} parent=1 // pred_check
      _
    $region11: #{_losses_pallas.1} parent=1 // pred_check_branch
      %26 = sbr.rel (0) target = $region13
    $region12: #{_losses_pallas.1} parent=1 // pred_region
      %s27 = sadd.s32 0, 0
      %p28 = scmp.lt.s32.totalorder %s27, 0
      %s29 = scalar_select %p28, %s27, 0
      %p30 = scmp.lt.s32.totalorder %s29, 0
      %s31 = scalar_select %p30, %s29, 0
      %s32 = smul.addr %s31, 8
      %s33 = scalar_lea.vmem %s2, %s32
      %s34 = sadd.s32 0, 0
      %p35 = scmp.lt.s32.totalorder %s34, 0
      %s36 = scalar_select %p35, %s34, 0
    $region13: #{_losses_pallas.1} parent=1 // pred_fallthru
      _
    // Predicated region
    $region14: #{_losses_pallas.1} parent=1 // pred_check
      _
    $region15: #{_losses_pallas.1} parent=1 // pred_check_branch
      %38 = sbr.rel (0) target = $region17
    $region16: #{_losses_pallas.1} parent=1 // pred_region
      %s39 = sadd.s32 0, 0
      %p40 = scmp.lt.s32.totalorder %s39, 0
      %s41 = scalar_select %p40, %s39, 0
      %s43 = ssub.s32 128, 128
      %44 = vsyncadd [#allocation6], %s43
      %s45 = smul.addr %s41, 128
      %s46 = scalar_lea.hbm %s3, %s45
      %s48 = sshll.u32 [#allocation5], 4
      %s49 = int_to_ptr.vmem [resolvable:$true] %s48
      %51 = dma.hbm_to_vmem [thread:$0]  %s46, 128, %s49, [#allocation6]
    $region17: #{_losses_pallas.1} parent=1 // pred_fallthru
      _
    // Predicated region
    $region18: #{_losses_pallas.1} parent=1 // pred_check
      _
    $region19: #{_losses_pallas.1} parent=1 // pred_check_branch
      %53 = sbr.rel (0) target = $region21
    $region20: #{_losses_pallas.1} parent=1 // pred_region
      %54 = dma.done [#allocation6], 128
    $region21: #{_losses_pallas.1} parent=1 // pred_fallthru
      _
    %s55 = sadd.s32 0, 0
    %p56 = scmp.lt.s32.totalorder %s55, 0
    %s57 = scalar_select %p56, %s55, 0
    %p58 = scmp.lt.s32.totalorder %s57, 0
    %s59 = scalar_select %p58, %s57, 0
    %s60 = smul.addr %s59, 8
    %s61 = scalar_lea.vmem %s0, %s60
    %s62 = sadd.s32 0, 0
    %p63 = scmp.lt.s32.totalorder %s62, 0
    %s64 = scalar_select %p63, %s62, 0
    %p65 = scmp.lt.s32.totalorder %s64, 0
    %s66 = scalar_select %p65, %s64, 0
    %s67 = smul.addr %s66, 8
    %s68 = scalar_lea.vmem %s2, %s67
    %s69 = sadd.s32 0, 0
    %p70 = scmp.lt.s32.totalorder %s69, 0
    %s71 = scalar_select %p70, %s69, 0
    %p72 = scmp.lt.s32.totalorder %s71, 0
    %s73 = scalar_select %p72, %s71, 0
    %s74 = smul.addr %s73, 8
    %s75 = scalar_lea.vmem %s0, %s74
    %s76 = sadd.s32 0, 0
    %p77 = scmp.lt.s32.totalorder %s76, 0
    %s78 = scalar_select %p77, %s76, 0
    %s79 = sadd.s32 0, 0
    %p80 = scmp.lt.s32.totalorder %s79, 0
    %s81 = scalar_select %p80, %s79, 0
    %p82 = scmp.lt.s32.totalorder %s81, 0
    %s83 = scalar_select %p82, %s81, 0
    %s84 = smul.addr %s83, 8
    %s85 = scalar_lea.vmem %s2, %s84
    %s86 = sadd.s32 0, 0
    %p87 = scmp.lt.s32.totalorder %s86, 0
    %s88 = scalar_select %p87, %s86, 0
    %s89 = sadd.s32 0, 0
    %p90 = scmp.lt.s32.totalorder %s89, 0
    %s91 = scalar_select %p90, %s89, 0
    %p92 = scmp.eq.s32.totalorder 0, 0
    // Predicated region
    $region22: #{_losses_pallas.1} parent=1 // pred_check
      %p93 = pneg %p92
    $region23: #{_losses_pallas.1} parent=1 // pred_check_branch
      %95 = sbr.rel (%p93) target = $region25
    $region24: #{_losses_pallas.1} parent=1 // pred_region
      %v96 = vlaneseq
      %v97 = vand.u32 %v96, 127
      %vm98 = vcmask 253952
      %99 = vst.msk [vmem:[#allocation2] sm:$0x1] %vm98, %v97
      %vm100 = vcmask 7168
      %101 = vst.msk [vmem:[#allocation3] sm:$0xff] %vm100, 0.0
      %102 = vst.msk [vmem:[#allocation4] sm:$0xff] %vm100, 0.0
    $region25: #{_losses_pallas.1} parent=1 // pred_fallthru
      _
    %s103 = sadd.s32 0, 0
    %s104 = smul.u32 %s103, 8
    %s105 = scalar_lea.vmem %s1, %s104
    %v106 = vld [vmem:[%s105] sm:$0xff]
    %v107 = vlaneseq
    %v108 = vshrl.u32 %v107, 7
    %v109 = vstv %s104
    %v110 = vadd.s32 %v109, %v108
    %vm111 = vcmp.lt.s32.totalorder %v110, 8
    %v112 = vld [vmem:[%s75] sm:$0xff]
    %v113 = vld [vmem:[#allocation2] sm:$0x1]
    %v114 = vlaneseq
    %v115 = vshrl.u32 %v114, 7
    %v116 = vsub.s32 0, %v115
    %v117 = vrot.slane %v113, %v116
    %118 = vset.pattern.permute.xlu0 0
    %119 = vperm.xlu0 %118, %v106
    %v120 = vpop.permute.xlu0 %119
    %vm121 = vcmp.eq.s32.totalorder %v117, %v120
    %v122 = vsel %vm121, %v112, 0.0
    %vm123 = vcmask 261120
    %v124 = vsel %vm123, %v122, 0.0
    %125 = vadd.xlane.f32.xlu0 %v124
    %v126 = vpop.xlane.xlu0 %125
    %v127 = vsel %vm123, %v112, -inf
    %128 = vmax.xlane.f32.xlu0 %v127
    %v129 = vpop.xlane.xlu0 %128
    %v130 = vsub.f32 %v112, %v129
    %v131 = vmul.f32 %v130, 1.442695
    %v132 = vpow.pop %v131
    %v133 = vsel %vm123, %v132, 0.0
    %134 = vadd.xlane.f32.xlu0 %v133
    %v135 = vpop.xlane.xlu0 %134
    %v136 = vlog2.pop %v135
    %v137 = vmul.f32 %v136, 0.6931472
    %v138 = vadd.f32 %v129, %v137
    %v139 = vld [vmem:[#allocation3] sm:$0xff]
    %v140 = vsub.f32 %v138, %v126
    %v141 = vsel %vm111, %v140, 0.0
    %v142 = vadd.f32 %v139, %v141
    %vm143 = vcmask 7168
    %144 = vst.msk [vmem:[#allocation3] sm:$0xff] %vm143, %v142
    %v145 = vld [vmem:[%s85] sm:$0xff]
    %v146 = vld [vmem:[#allocation5] sm:$0xff]
    %v147 = vsub.f32 %v145, %v146
    %v148 = vmul.f32 %v147, %v147
    %v149 = vsel %vm123, %v148, 0.0
    %150 = vadd.xlane.f32.xlu0 %v149
    %v151 = vpop.xlane.xlu0 %150
    %v152 = vld [vmem:[#allocation4] sm:$0xff]
    %v153 = vsel %vm111, %v151, 0.0
    %v154 = vadd.f32 %v152, %v153
    %155 = vst.msk [vmem:[#allocation4] sm:$0xff] %vm143, %v154
    // Predicated region
    $region26: #{_losses_pallas.1} parent=1 // pred_check
      %p156 = pneg %p92
    $region27: #{_losses_pallas.1} parent=1 // pred_check_branch
      %158 = sbr.rel (%p156) target = $region29
    $region28: #{_losses_pallas.1} parent=1 // pred_region
      %v159 = vld [vmem:[#allocation3] sm:$0xff]
      %v160 = vsel %vm143, %v159, 0.0
      %161 = vadd.xlane.f32.xlu0 %v160
      %v162 = vpop.xlane.xlu0 %161
      %v163 = vrot.slane %v162, 4
      %v164 = vadd.f32 %v162, %v163
      %v165 = vrot.slane %v164, 2
      %v166 = vadd.f32 %v164, %v165
      %v167 = vrot.slane %v166, 1
      %v168 = vadd.f32 %v166, %v167
      %s169 = vtos %v168
      %s170 = scalar_lea.smem [#allocation8], 0
      %171 = sst [smem:[%s170]] %s169
      %v172 = vld [vmem:[#allocation4] sm:$0xff]
      %v173 = vsel %vm143, %v172, 0.0
      %174 = vadd.xlane.f32.xlu0 %v173
      %v175 = vpop.xlane.xlu0 %174
      %v176 = vrot.slane %v175, 4
      %v177 = vadd.f32 %v175, %v176
      %v178 = vrot.slane %v177, 2
      %v179 = vadd.f32 %v177, %v178
      %v180 = vrot.slane %v179, 1
      %v181 = vadd.f32 %v179, %v180
      %s182 = vtos %v181
      %s183 = scalar_lea.smem [#allocation8], 1
      %184 = sst [smem:[%s183]] %s182
    $region29: #{_losses_pallas.1} parent=1 // pred_fallthru
      _
    // Predicated region
    $region30: #{_losses_pallas.1} parent=1 // pred_check
      _
    $region31: #{_losses_pallas.1} parent=1 // pred_check_branch
      %186 = sbr.rel (0) target = $region33
    $region32: #{_losses_pallas.1} parent=1 // pred_region
      %s188 = ssub.s32 16, 16
      %189 = vsyncadd [#allocation7], %s188
      %s191 = sshll.u32 %s4, 4
      %s192 = int_to_ptr.vmem [resolvable:$true] %s191
      %194 = dma.smem_to_vmem [#allocation8], 16, %s192, [#allocation7]
    $region33: #{_losses_pallas.1} parent=1 // pred_fallthru
      _
    // Predicated region
    $region34: #{_losses_pallas.1} parent=1 // pred_check
      _
    $region35: #{_losses_pallas.1} parent=1 // pred_check_branch
      %196 = sbr.rel (0) target = $region37
    $region36: #{_losses_pallas.1} parent=1 // pred_region
      %197 = dma.done [#allocation7], 16
    $region37: #{_losses_pallas.1} parent=1 // pred_fallthru
      _
    %198 = sfence
    %199 = vsyncpa [#allocation6], 1
    %200 = vsyncpa [#allocation7], 1

</llo_original>
